<compile_context>
chip_gen: v5e
topology: v5e:2x2
jax: 0.10.0
libtpu: 0.0.40
codegen_flags: <defaults>
</compile_context>

<pallas_src>
import math
import functools

import jax
import jax.numpy as jnp
from jax import lax
from jax.experimental import pallas as pl
from jax.experimental.pallas import tpu as pltpu


# ----------------------------- Pallas kernel --------------------------------

def _layer_norm(x, w, b, eps=1e-5):
    mu = jnp.mean(x, axis=-1, keepdims=True)
    var = jnp.mean((x - mu) ** 2, axis=-1, keepdims=True)
    return (x - mu) * lax.rsqrt(var + eps) * w + b


def transformer_kernel(
    x_ref, pe_ref, w_emb_ref, w_qkv_ref, b_qkv_ref, w_o_ref,
    w1_ref, b1_ref, w2_ref, vecs_ref, o_ref,
    *, num_heads, head_dim,
):
    # One grid step == one batch element (sequence of S tokens).
    S = x_ref.shape[0]
    E = w_emb_ref.shape[1]
    H, Dh = num_heads, head_dim
    f32 = jnp.float32

    # Packed small operands: rows = [b_o, ln1_w, ln1_b, ln2_w, ln2_b, b2, w_out, b_out]
    vecs = vecs_ref[...]

    # --- embedding Linear(F,E); sqrt(E) folded into weights, bias+PE pre-summed ---
    h = jnp.dot(x_ref[...], w_emb_ref[...], preferred_element_type=f32) + pe_ref[...]

    # --- fused QKV projection: single (S,E)@(E,3E) matmul (Q pre-scaled by 1/sqrt(Dh)) ---
    qkv = jnp.dot(h, w_qkv_ref[...], preferred_element_type=f32) + b_qkv_ref[...]

    # --- attention core: static per-head loop over 2-D lane slices ---
    # (avoids 3-D reshape/transpose relayouts; MXU work identical to a batched
    #  dot_general, which unrolls over the head dim anyway)
    head_outs = []
    for hh in range(H):
        q_h = qkv[:, hh * Dh:(hh + 1) * Dh]                 # (S, Dh), already /sqrt(Dh)
        k_h = qkv[:, E + hh * Dh:E + (hh + 1) * Dh]         # (S, Dh)
        v_h = qkv[:, 2 * E + hh * Dh:2 * E + (hh + 1) * Dh]  # (S, Dh)

        # scores = q_h @ k_h.T  (NT matmul, contraction on last dim of both)
        s = lax.dot_general(q_h, k_h, (((1,), (1,)), ((), ())),
                            preferred_element_type=f32)      # (S, S)
        s = s - jnp.max(s, axis=-1, keepdims=True)
        p = jnp.exp(s)
        denom = jnp.sum(p, axis=-1, keepdims=True)
        r = pl.reciprocal(denom, approx=True)                 # EUP slot (otherwise idle)
        r = r * (2.0 - denom * r)                             # one Newton step -> f32-exact
        p = p * r
        head_outs.append(jnp.dot(p, v_h, preferred_element_type=f32))  # (S, Dh)

    attn = jnp.concatenate(head_outs, axis=1)                 # (S, E)

    # --- single fused out_proj: (S,E)@(E,E) ---
    attn = jnp.dot(attn, w_o_ref[...], preferred_element_type=f32) + vecs[0:1]

    # post-norm encoder layer (PyTorch default norm_first=False, eps=1e-5)
    h = _layer_norm(h + attn, vecs[1:2], vecs[2:3])

    # --- feed-forward: Linear(E,4E) -> ReLU -> Linear(4E,E) ---
    ff = jnp.dot(h, w1_ref[...], preferred_element_type=f32) + b1_ref[...]
    ff = jnp.maximum(ff, 0.0)
    ff = jnp.dot(ff, w2_ref[...], preferred_element_type=f32) + vecs[5:6]

    h = _layer_norm(h + ff, vecs[3:4], vecs[4:5])

    # --- output head Linear(E,1) as VPU multiply + lane-reduce (no N=1 MXU pass) ---
    logits = jnp.sum(h * vecs[6:7], axis=-1, keepdims=True) + vecs[7:8, 0:1]
    o_ref[...] = jax.nn.sigmoid(logits) - 0.4


# ------------------------- parameter packing (one-time) ----------------------

def pack_params(params, pe, num_heads):
    """Fuse / transpose / scale / pack weights into kernel layout.  Called once,
    off the per-forward hot path."""
    E = params['w_emb'].shape[0]
    Dh = E // num_heads
    sqrt_e = math.sqrt(E)
    inv_sqrt_dh = 1.0 / math.sqrt(Dh)

    in_w, in_b = params['in_proj_w'], params['in_proj_b']          # (3E,E), (3E,)
    w_qkv = jnp.concatenate(
        [in_w[:E].T * inv_sqrt_dh, in_w[E:2 * E].T, in_w[2 * E:].T], axis=1)   # (E,3E)
    b_qkv = jnp.concatenate(
        [in_b[:E] * inv_sqrt_dh, in_b[E:2 * E], in_b[2 * E:]]).reshape(1, 3 * E)

    vecs = jnp.stack([
        params['out_proj_b'],
        params['ln1_w'], params['ln1_b'],
        params['ln2_w'], params['ln2_b'],
        params['b2'],
        params['wout'][0],
        jnp.full((E,), params['bout'][0], jnp.float32),
    ])                                                               # (8, E)

    return dict(
        pe_bias=(pe + params['b_emb'] * sqrt_e).astype(jnp.float32),  # (S, E)
        w_emb=params['w_emb'].T * sqrt_e,                             # (F, E)
        w_qkv=w_qkv, b_qkv=b_qkv,
        w_o=params['out_proj_w'].T,                                   # (E, E)
        w1=params['w1'].T, b1=params['b1'].reshape(1, -1),            # (E,4E),(1,4E)
        w2=params['w2'].T,                                            # (4E, E)
        vecs=vecs,
    )


# ------------------------------- wrapper -------------------------------------

@functools.partial(jax.jit, static_argnames=("num_heads",))
def transformer_forward(x, packed, *, num_heads):
    B, S, F = x.shape
    E = packed['w_emb'].shape[1]
    FF = packed['w1'].shape[1]
    Dh = E // num_heads

    kernel = functools.partial(transformer_kernel, num_heads=num_heads, head_dim=Dh)
    out = pl.pallas_call(
        kernel,
        out_shape=jax.ShapeDtypeStruct((B, S, 1), jnp.float32),
        grid_spec=pltpu.PrefetchScalarGridSpec(
            num_scalar_prefetch=0,
            grid=(B,),                                                 # batch-parallel
            in_specs=[
                pl.BlockSpec((None, S, F), lambda b: (b, 0, 0)),       # x (per batch)
                pl.BlockSpec((S, E), lambda b: (0, 0)),                # pe + emb bias
                pl.BlockSpec((F, E), lambda b: (0, 0)),                # w_emb
                pl.BlockSpec((E, 3 * E), lambda b: (0, 0)),            # fused W_qkv
                pl.BlockSpec((1, 3 * E), lambda b: (0, 0)),            # fused b_qkv
                pl.BlockSpec((E, E), lambda b: (0, 0)),                # W_out_proj
                pl.BlockSpec((E, FF), lambda b: (0, 0)),               # W1
                pl.BlockSpec((1, FF), lambda b: (0, 0)),               # b1
                pl.BlockSpec((FF, E), lambda b: (0, 0)),               # W2
                pl.BlockSpec((8, E), lambda b: (0, 0)),                # packed vectors
            ],
            out_specs=pl.BlockSpec((None, S, 1), lambda b: (b, 0, 0)),
        ),
        compiler_params=pltpu.CompilerParams(
            dimension_semantics=("parallel",)),                        # 2 TCs on v7x
    )(x, packed['pe_bias'], packed['w_emb'], packed['w_qkv'], packed['b_qkv'],
      packed['w_o'], packed['w1'], packed['b1'], packed['w2'], packed['vecs'])
    return out.reshape(B, S)


# --------------------------- params / reference ------------------------------

def positional_encoding(S, E):
    # TODO(synk): the PyTorch module keeps this buffer in float64; computed in float32 here.
    pos = jnp.arange(S, dtype=jnp.float32)[:, None]
    div = jnp.exp(jnp.arange(0, E, 2, dtype=jnp.float32) * (-math.log(10000.0) / E))
    pe = jnp.zeros((S, E), jnp.float32)
    pe = pe.at[:, 0::2].set(jnp.sin(pos * div))
    pe = pe.at[:, 1::2].set(jnp.cos(pos * div))
    return pe


def init_params(key, F, E, FF):
    ks = jax.random.split(key, 6)

    def linear(k, out_f, in_f):
        bound = 1.0 / math.sqrt(in_f)
        kw, kb = jax.random.split(k)
        w = jax.random.uniform(kw, (out_f, in_f), jnp.float32, -bound, bound)
        b = jax.random.uniform(kb, (out_f,), jnp.float32, -bound, bound)
        return w, b

    w_emb, b_emb = linear(ks[0], E, F)
    in_proj_w, in_proj_b = linear(ks[1], 3 * E, E)
    out_proj_w, out_proj_b = linear(ks[2], E, E)
    w1, b1 = linear(ks[3], FF, E)
    w2, b2 = linear(ks[4], E, FF)
    wout, bout = linear(ks[5], 1, E)
    return dict(
        w_emb=w_emb, b_emb=b_emb,
        in_proj_w=in_proj_w, in_proj_b=in_proj_b,
        out_proj_w=out_proj_w, out_proj_b=out_proj_b,
        ln1_w=jnp.ones((E,), jnp.float32), ln1_b=jnp.zeros((E,), jnp.float32),
        ln2_w=jnp.ones((E,), jnp.float32), ln2_b=jnp.zeros((E,), jnp.float32),
        w1=w1, b1=b1, w2=w2, b2=b2,
        wout=wout, bout=bout,
    )


def reference_forward(x, params, pe, num_heads):
    """Pure-JAX reference mirroring the PyTorch forward (for correctness check)."""
    B, S, F = x.shape
    E = params['w_emb'].shape[0]
    Dh = E // num_heads

    def ln(t, w, b, eps=1e-5):
        mu = t.mean(-1, keepdims=True)
        var = ((t - mu) ** 2).mean(-1, keepdims=True)
        return (t - mu) / jnp.sqrt(var + eps) * w + b

    h = (x @ params['w_emb'].T + params['b_emb']) * math.sqrt(E) + pe[None]
    qkv = h @ params['in_proj_w'].T + params['in_proj_b']
    q, k, v = jnp.split(qkv, 3, axis=-1)
    q = q.reshape(B, S, num_heads, Dh).transpose(0, 2, 1, 3)
    k = k.reshape(B, S, num_heads, Dh).transpose(0, 2, 1, 3)
    v = v.reshape(B, S, num_heads, Dh).transpose(0, 2, 1, 3)
    s = (q @ k.transpose(0, 1, 3, 2)) / math.sqrt(Dh)
    p = jax.nn.softmax(s, axis=-1)
    o = (p @ v).transpose(0, 2, 1, 3).reshape(B, S, E)
    o = o @ params['out_proj_w'].T + params['out_proj_b']
    h = ln(h + o, params['ln1_w'], params['ln1_b'])
    ff = jax.nn.relu(h @ params['w1'].T + params['b1']) @ params['w2'].T + params['b2']
    h = ln(h + ff, params['ln2_w'], params['ln2_b'])
    out = jax.nn.sigmoid(h @ params['wout'].T + params['bout']) - 0.4
    return out[..., 0]


# --------------------------------- main ---------------------------------------

if __name__ == "__main__":
    # robot_bounding_box = (4, 2) -> seq len 8, obs-per-voxel = 16, embedding = 32, 4 heads
    B, BBOX, F, E, H = 2, (4, 2), 16, 32, 4
    S = BBOX[0] * BBOX[1]
    FF = 4 * E

    key = jax.random.PRNGKey(0)
    k_params, k_x = jax.random.split(key)
    params = init_params(k_params, F, E, FF)
    pe = positional_encoding(S, E)
    x = jax.random.normal(k_x, (B, S, F), jnp.float32)

    packed = pack_params(params, pe, H)          # one-time weight prep (off hot path)
    packed = jax.block_until_ready(packed)

    out = transformer_forward(x, packed, num_heads=H)
    out = jax.block_until_ready(out)

    ref = reference_forward(x, params, pe, H)
    assert out.shape == (B, S), out.shape
    assert jnp.allclose(out, ref, atol=1e-4, rtol=1e-4), \
        float(jnp.max(jnp.abs(out - ref)))

    print("KERNEL_OK")
</pallas_src>

<mosaic_0001>
module attributes {stable_mosaic.version = 11 : i64} {
  func.func @transformer_kernel(%arg0: i32, %arg1: memref<1x8x16xf32, #tpu.memory_space<vmem>>, %arg2: memref<8x32xf32, #tpu.memory_space<vmem>>, %arg3: memref<16x32xf32, #tpu.memory_space<vmem>>, %arg4: memref<32x96xf32, #tpu.memory_space<vmem>>, %arg5: memref<1x96xf32, #tpu.memory_space<vmem>>, %arg6: memref<32x32xf32, #tpu.memory_space<vmem>>, %arg7: memref<32x128xf32, #tpu.memory_space<vmem>>, %arg8: memref<1x128xf32, #tpu.memory_space<vmem>>, %arg9: memref<128x32xf32, #tpu.memory_space<vmem>>, %arg10: memref<8x32xf32, #tpu.memory_space<vmem>>, %arg11: memref<1x8x1xf32, #tpu.memory_space<vmem>>) attributes {dimension_semantics = [#tpu.dimension_semantics<parallel>], iteration_bounds = array<i64: 2>, scalar_prefetch = 0 : i64, scratch_operands = 0 : i64, tpu.core_type = #tpu.core_type<tc>, window_params = [{transform_indices = @transform_0, window_bounds = array<i64: 1, 8, 16>}, {pipeline_mode = #tpu.pipeline_mode<synchronous>, transform_indices = @transform_1, window_bounds = array<i64: 8, 32>}, {pipeline_mode = #tpu.pipeline_mode<synchronous>, transform_indices = @transform_2, window_bounds = array<i64: 16, 32>}, {pipeline_mode = #tpu.pipeline_mode<synchronous>, transform_indices = @transform_3, window_bounds = array<i64: 32, 96>}, {pipeline_mode = #tpu.pipeline_mode<synchronous>, transform_indices = @transform_4, window_bounds = array<i64: 1, 96>}, {pipeline_mode = #tpu.pipeline_mode<synchronous>, transform_indices = @transform_5, window_bounds = array<i64: 32, 32>}, {pipeline_mode = #tpu.pipeline_mode<synchronous>, transform_indices = @transform_6, window_bounds = array<i64: 32, 128>}, {pipeline_mode = #tpu.pipeline_mode<synchronous>, transform_indices = @transform_7, window_bounds = array<i64: 1, 128>}, {pipeline_mode = #tpu.pipeline_mode<synchronous>, transform_indices = @transform_8, window_bounds = array<i64: 128, 32>}, {pipeline_mode = #tpu.pipeline_mode<synchronous>, transform_indices = @transform_9, window_bounds = array<i64: 8, 32>}, {transform_indices = @transform_10, window_bounds = array<i64: 1, 8, 1>}]} {
    %c0 = arith.constant 0 : index
    %c0_0 = arith.constant 0 : index
    %0 = vector.load %arg10[%c0, %c0_0] : memref<8x32xf32, #tpu.memory_space<vmem>>, vector<8x32xf32>
    %c0_1 = arith.constant 0 : index
    %c0_2 = arith.constant 0 : index
    %c0_3 = arith.constant 0 : index
    %1 = vector.load %arg1[%c0_1, %c0_2, %c0_3] : memref<1x8x16xf32, #tpu.memory_space<vmem>>, vector<1x8x16xf32>
    %2 = vector.shape_cast %1 : vector<1x8x16xf32> to vector<8x16xf32>
    %c0_4 = arith.constant 0 : index
    %c0_5 = arith.constant 0 : index
    %3 = vector.load %arg3[%c0_4, %c0_5] : memref<16x32xf32, #tpu.memory_space<vmem>>, vector<16x32xf32>
    %cst = arith.constant dense<0.000000e+00> : vector<8x32xf32>
    %4 = tpu.matmul %2, %3, %cst {dimension_numbers = #tpu.dot_dimension_numbers<[1], [0], [0], [1], [0, 0, 1, 1], [], []>} : vector<8x16xf32>, vector<16x32xf32>, vector<8x32xf32> -> vector<8x32xf32>
    %c0_6 = arith.constant 0 : index
    %c0_7 = arith.constant 0 : index
    %5 = vector.load %arg2[%c0_6, %c0_7] : memref<8x32xf32, #tpu.memory_space<vmem>>, vector<8x32xf32>
    %6 = arith.addf %4, %5 : vector<8x32xf32>
    %c0_8 = arith.constant 0 : index
    %c0_9 = arith.constant 0 : index
    %7 = vector.load %arg4[%c0_8, %c0_9] : memref<32x96xf32, #tpu.memory_space<vmem>>, vector<32x96xf32>
    %cst_10 = arith.constant dense<0.000000e+00> : vector<8x96xf32>
    %8 = tpu.matmul %6, %7, %cst_10 {dimension_numbers = #tpu.dot_dimension_numbers<[1], [0], [0], [1], [0, 0, 1, 1], [], []>} : vector<8x32xf32>, vector<32x96xf32>, vector<8x96xf32> -> vector<8x96xf32>
    %c0_11 = arith.constant 0 : index
    %c0_12 = arith.constant 0 : index
    %9 = vector.load %arg5[%c0_11, %c0_12] : memref<1x96xf32, #tpu.memory_space<vmem>>, vector<1x96xf32>
    %10 = vector.broadcast %9 : vector<1x96xf32> to vector<8x96xf32>
    %11 = arith.addf %8, %10 : vector<8x96xf32>
    %12 = vector.extract_strided_slice %11 {offsets = [0, 0], sizes = [8, 8], strides = [1, 1]} : vector<8x96xf32> to vector<8x8xf32>
    %13 = vector.extract_strided_slice %11 {offsets = [0, 32], sizes = [8, 8], strides = [1, 1]} : vector<8x96xf32> to vector<8x8xf32>
    %14 = vector.extract_strided_slice %11 {offsets = [0, 64], sizes = [8, 8], strides = [1, 1]} : vector<8x96xf32> to vector<8x8xf32>
    %cst_13 = arith.constant dense<0.000000e+00> : vector<8x8xf32>
    %15 = tpu.matmul %12, %13, %cst_13 {dimension_numbers = #tpu.dot_dimension_numbers<[1], [1], [0], [0], [0, 0, 1, 0], [], []>} : vector<8x8xf32>, vector<8x8xf32>, vector<8x8xf32> -> vector<8x8xf32>
    %cst_14 = arith.constant dense<0xFF800000> : vector<8xf32>
    %16 = vector.multi_reduction <maximumf>, %15, %cst_14 [1] : vector<8x8xf32> to vector<8xf32>
    %17 = vector.shape_cast %16 : vector<8xf32> to vector<8x1xf32>
    %18 = vector.broadcast %17 : vector<8x1xf32> to vector<8x8xf32>
    %19 = arith.subf %15, %18 : vector<8x8xf32>
    %20 = math.exp %19 : vector<8x8xf32>
    %cst_15 = arith.constant dense<0.000000e+00> : vector<8xf32>
    %21 = vector.multi_reduction <add>, %20, %cst_15 [1] : vector<8x8xf32> to vector<8xf32>
    %22 = vector.shape_cast %21 : vector<8xf32> to vector<8x1xf32>
    %23 = tpu.reciprocal %22 {approx = true} : vector<8x1xf32> -> vector<8x1xf32>
    %24 = arith.mulf %22, %23 : vector<8x1xf32>
    %cst_16 = arith.constant 2.000000e+00 : f32
    %25 = vector.broadcast %cst_16 : f32 to vector<8x1xf32>
    %26 = arith.subf %25, %24 : vector<8x1xf32>
    %27 = arith.mulf %23, %26 : vector<8x1xf32>
    %28 = vector.broadcast %27 : vector<8x1xf32> to vector<8x8xf32>
    %29 = arith.mulf %20, %28 : vector<8x8xf32>
    %cst_17 = arith.constant dense<0.000000e+00> : vector<8x8xf32>
    %30 = tpu.matmul %29, %14, %cst_17 {dimension_numbers = #tpu.dot_dimension_numbers<[1], [0], [0], [1], [0, 0, 1, 1], [], []>} : vector<8x8xf32>, vector<8x8xf32>, vector<8x8xf32> -> vector<8x8xf32>
    %31 = vector.extract_strided_slice %11 {offsets = [0, 8], sizes = [8, 8], strides = [1, 1]} : vector<8x96xf32> to vector<8x8xf32>
    %32 = vector.extract_strided_slice %11 {offsets = [0, 40], sizes = [8, 8], strides = [1, 1]} : vector<8x96xf32> to vector<8x8xf32>
    %33 = vector.extract_strided_slice %11 {offsets = [0, 72], sizes = [8, 8], strides = [1, 1]} : vector<8x96xf32> to vector<8x8xf32>
    %cst_18 = arith.constant dense<0.000000e+00> : vector<8x8xf32>
    %34 = tpu.matmul %31, %32, %cst_18 {dimension_numbers = #tpu.dot_dimension_numbers<[1], [1], [0], [0], [0, 0, 1, 0], [], []>} : vector<8x8xf32>, vector<8x8xf32>, vector<8x8xf32> -> vector<8x8xf32>
    %cst_19 = arith.constant dense<0xFF800000> : vector<8xf32>
    %35 = vector.multi_reduction <maximumf>, %34, %cst_19 [1] : vector<8x8xf32> to vector<8xf32>
    %36 = vector.shape_cast %35 : vector<8xf32> to vector<8x1xf32>
    %37 = vector.broadcast %36 : vector<8x1xf32> to vector<8x8xf32>
    %38 = arith.subf %34, %37 : vector<8x8xf32>
    %39 = math.exp %38 : vector<8x8xf32>
    %cst_20 = arith.constant dense<0.000000e+00> : vector<8xf32>
    %40 = vector.multi_reduction <add>, %39, %cst_20 [1] : vector<8x8xf32> to vector<8xf32>
    %41 = vector.shape_cast %40 : vector<8xf32> to vector<8x1xf32>
    %42 = tpu.reciprocal %41 {approx = true} : vector<8x1xf32> -> vector<8x1xf32>
    %43 = arith.mulf %41, %42 : vector<8x1xf32>
    %cst_21 = arith.constant 2.000000e+00 : f32
    %44 = vector.broadcast %cst_21 : f32 to vector<8x1xf32>
    %45 = arith.subf %44, %43 : vector<8x1xf32>
    %46 = arith.mulf %42, %45 : vector<8x1xf32>
    %47 = vector.broadcast %46 : vector<8x1xf32> to vector<8x8xf32>
    %48 = arith.mulf %39, %47 : vector<8x8xf32>
    %cst_22 = arith.constant dense<0.000000e+00> : vector<8x8xf32>
    %49 = tpu.matmul %48, %33, %cst_22 {dimension_numbers = #tpu.dot_dimension_numbers<[1], [0], [0], [1], [0, 0, 1, 1], [], []>} : vector<8x8xf32>, vector<8x8xf32>, vector<8x8xf32> -> vector<8x8xf32>
    %50 = vector.extract_strided_slice %11 {offsets = [0, 16], sizes = [8, 8], strides = [1, 1]} : vector<8x96xf32> to vector<8x8xf32>
    %51 = vector.extract_strided_slice %11 {offsets = [0, 48], sizes = [8, 8], strides = [1, 1]} : vector<8x96xf32> to vector<8x8xf32>
    %52 = vector.extract_strided_slice %11 {offsets = [0, 80], sizes = [8, 8], strides = [1, 1]} : vector<8x96xf32> to vector<8x8xf32>
    %cst_23 = arith.constant dense<0.000000e+00> : vector<8x8xf32>
    %53 = tpu.matmul %50, %51, %cst_23 {dimension_numbers = #tpu.dot_dimension_numbers<[1], [1], [0], [0], [0, 0, 1, 0], [], []>} : vector<8x8xf32>, vector<8x8xf32>, vector<8x8xf32> -> vector<8x8xf32>
    %cst_24 = arith.constant dense<0xFF800000> : vector<8xf32>
    %54 = vector.multi_reduction <maximumf>, %53, %cst_24 [1] : vector<8x8xf32> to vector<8xf32>
    %55 = vector.shape_cast %54 : vector<8xf32> to vector<8x1xf32>
    %56 = vector.broadcast %55 : vector<8x1xf32> to vector<8x8xf32>
    %57 = arith.subf %53, %56 : vector<8x8xf32>
    %58 = math.exp %57 : vector<8x8xf32>
    %cst_25 = arith.constant dense<0.000000e+00> : vector<8xf32>
    %59 = vector.multi_reduction <add>, %58, %cst_25 [1] : vector<8x8xf32> to vector<8xf32>
    %60 = vector.shape_cast %59 : vector<8xf32> to vector<8x1xf32>
    %61 = tpu.reciprocal %60 {approx = true} : vector<8x1xf32> -> vector<8x1xf32>
    %62 = arith.mulf %60, %61 : vector<8x1xf32>
    %cst_26 = arith.constant 2.000000e+00 : f32
    %63 = vector.broadcast %cst_26 : f32 to vector<8x1xf32>
    %64 = arith.subf %63, %62 : vector<8x1xf32>
    %65 = arith.mulf %61, %64 : vector<8x1xf32>
    %66 = vector.broadcast %65 : vector<8x1xf32> to vector<8x8xf32>
    %67 = arith.mulf %58, %66 : vector<8x8xf32>
    %cst_27 = arith.constant dense<0.000000e+00> : vector<8x8xf32>
    %68 = tpu.matmul %67, %52, %cst_27 {dimension_numbers = #tpu.dot_dimension_numbers<[1], [0], [0], [1], [0, 0, 1, 1], [], []>} : vector<8x8xf32>, vector<8x8xf32>, vector<8x8xf32> -> vector<8x8xf32>
    %69 = vector.extract_strided_slice %11 {offsets = [0, 24], sizes = [8, 8], strides = [1, 1]} : vector<8x96xf32> to vector<8x8xf32>
    %70 = vector.extract_strided_slice %11 {offsets = [0, 56], sizes = [8, 8], strides = [1, 1]} : vector<8x96xf32> to vector<8x8xf32>
    %71 = vector.extract_strided_slice %11 {offsets = [0, 88], sizes = [8, 8], strides = [1, 1]} : vector<8x96xf32> to vector<8x8xf32>
    %cst_28 = arith.constant dense<0.000000e+00> : vector<8x8xf32>
    %72 = tpu.matmul %69, %70, %cst_28 {dimension_numbers = #tpu.dot_dimension_numbers<[1], [1], [0], [0], [0, 0, 1, 0], [], []>} : vector<8x8xf32>, vector<8x8xf32>, vector<8x8xf32> -> vector<8x8xf32>
    %cst_29 = arith.constant dense<0xFF800000> : vector<8xf32>
    %73 = vector.multi_reduction <maximumf>, %72, %cst_29 [1] : vector<8x8xf32> to vector<8xf32>
    %74 = vector.shape_cast %73 : vector<8xf32> to vector<8x1xf32>
    %75 = vector.broadcast %74 : vector<8x1xf32> to vector<8x8xf32>
    %76 = arith.subf %72, %75 : vector<8x8xf32>
    %77 = math.exp %76 : vector<8x8xf32>
    %cst_30 = arith.constant dense<0.000000e+00> : vector<8xf32>
    %78 = vector.multi_reduction <add>, %77, %cst_30 [1] : vector<8x8xf32> to vector<8xf32>
    %79 = vector.shape_cast %78 : vector<8xf32> to vector<8x1xf32>
    %80 = tpu.reciprocal %79 {approx = true} : vector<8x1xf32> -> vector<8x1xf32>
    %81 = arith.mulf %79, %80 : vector<8x1xf32>
    %cst_31 = arith.constant 2.000000e+00 : f32
    %82 = vector.broadcast %cst_31 : f32 to vector<8x1xf32>
    %83 = arith.subf %82, %81 : vector<8x1xf32>
    %84 = arith.mulf %80, %83 : vector<8x1xf32>
    %85 = vector.broadcast %84 : vector<8x1xf32> to vector<8x8xf32>
    %86 = arith.mulf %77, %85 : vector<8x8xf32>
    %cst_32 = arith.constant dense<0.000000e+00> : vector<8x8xf32>
    %87 = tpu.matmul %86, %71, %cst_32 {dimension_numbers = #tpu.dot_dimension_numbers<[1], [0], [0], [1], [0, 0, 1, 1], [], []>} : vector<8x8xf32>, vector<8x8xf32>, vector<8x8xf32> -> vector<8x8xf32>
    %88 = tpu.concatenate %30, %49, %68, %87 in 1 : vector<8x8xf32>, vector<8x8xf32>, vector<8x8xf32>, vector<8x8xf32> -> vector<8x32xf32>
    %c0_33 = arith.constant 0 : index
    %c0_34 = arith.constant 0 : index
    %89 = vector.load %arg6[%c0_33, %c0_34] : memref<32x32xf32, #tpu.memory_space<vmem>>, vector<32x32xf32>
    %cst_35 = arith.constant dense<0.000000e+00> : vector<8x32xf32>
    %90 = tpu.matmul %88, %89, %cst_35 {dimension_numbers = #tpu.dot_dimension_numbers<[1], [0], [0], [1], [0, 0, 1, 1], [], []>} : vector<8x32xf32>, vector<32x32xf32>, vector<8x32xf32> -> vector<8x32xf32>
    %91 = vector.extract_strided_slice %0 {offsets = [0, 0], sizes = [1, 32], strides = [1, 1]} : vector<8x32xf32> to vector<1x32xf32>
    %92 = vector.broadcast %91 : vector<1x32xf32> to vector<8x32xf32>
    %93 = arith.addf %90, %92 : vector<8x32xf32>
    %94 = arith.addf %6, %93 : vector<8x32xf32>
    %95 = vector.extract_strided_slice %0 {offsets = [1, 0], sizes = [1, 32], strides = [1, 1]} : vector<8x32xf32> to vector<1x32xf32>
    %96 = vector.extract_strided_slice %0 {offsets = [2, 0], sizes = [1, 32], strides = [1, 1]} : vector<8x32xf32> to vector<1x32xf32>
    %cst_36 = arith.constant dense<0.000000e+00> : vector<8xf32>
    %97 = vector.multi_reduction <add>, %94, %cst_36 [1] : vector<8x32xf32> to vector<8xf32>
    %98 = vector.shape_cast %97 : vector<8xf32> to vector<8x1xf32>
    %cst_37 = arith.constant 3.200000e+01 : f32
    %99 = vector.broadcast %cst_37 : f32 to vector<8x1xf32>
    %100 = arith.divf %98, %99 : vector<8x1xf32>
    %101 = vector.broadcast %100 : vector<8x1xf32> to vector<8x32xf32>
    %102 = arith.subf %94, %101 : vector<8x32xf32>
    %103 = arith.mulf %102, %102 : vector<8x32xf32>
    %cst_38 = arith.constant dense<0.000000e+00> : vector<8xf32>
    %104 = vector.multi_reduction <add>, %103, %cst_38 [1] : vector<8x32xf32> to vector<8xf32>
    %105 = vector.shape_cast %104 : vector<8xf32> to vector<8x1xf32>
    %cst_39 = arith.constant 3.200000e+01 : f32
    %106 = vector.broadcast %cst_39 : f32 to vector<8x1xf32>
    %107 = arith.divf %105, %106 : vector<8x1xf32>
    %108 = vector.broadcast %100 : vector<8x1xf32> to vector<8x32xf32>
    %109 = arith.subf %94, %108 : vector<8x32xf32>
    %cst_40 = arith.constant 9.99999974E-6 : f32
    %110 = vector.broadcast %cst_40 : f32 to vector<8x1xf32>
    %111 = arith.addf %107, %110 : vector<8x1xf32>
    %112 = math.rsqrt %111 : vector<8x1xf32>
    %113 = vector.broadcast %112 : vector<8x1xf32> to vector<8x32xf32>
    %114 = arith.mulf %109, %113 : vector<8x32xf32>
    %115 = vector.broadcast %95 : vector<1x32xf32> to vector<8x32xf32>
    %116 = arith.mulf %114, %115 : vector<8x32xf32>
    %117 = vector.broadcast %96 : vector<1x32xf32> to vector<8x32xf32>
    %118 = arith.addf %116, %117 : vector<8x32xf32>
    %c0_41 = arith.constant 0 : index
    %c0_42 = arith.constant 0 : index
    %119 = vector.load %arg7[%c0_41, %c0_42] : memref<32x128xf32, #tpu.memory_space<vmem>>, vector<32x128xf32>
    %cst_43 = arith.constant dense<0.000000e+00> : vector<8x128xf32>
    %120 = tpu.matmul %118, %119, %cst_43 {dimension_numbers = #tpu.dot_dimension_numbers<[1], [0], [0], [1], [0, 0, 1, 1], [], []>} : vector<8x32xf32>, vector<32x128xf32>, vector<8x128xf32> -> vector<8x128xf32>
    %c0_44 = arith.constant 0 : index
    %c0_45 = arith.constant 0 : index
    %121 = vector.load %arg8[%c0_44, %c0_45] : memref<1x128xf32, #tpu.memory_space<vmem>>, vector<1x128xf32>
    %122 = vector.broadcast %121 : vector<1x128xf32> to vector<8x128xf32>
    %123 = arith.addf %120, %122 : vector<8x128xf32>
    %cst_46 = arith.constant 0.000000e+00 : f32
    %124 = vector.broadcast %cst_46 : f32 to vector<8x128xf32>
    %125 = arith.maximumf %123, %124 : vector<8x128xf32>
    %c0_47 = arith.constant 0 : index
    %c0_48 = arith.constant 0 : index
    %126 = vector.load %arg9[%c0_47, %c0_48] : memref<128x32xf32, #tpu.memory_space<vmem>>, vector<128x32xf32>
    %cst_49 = arith.constant dense<0.000000e+00> : vector<8x32xf32>
    %127 = tpu.matmul %125, %126, %cst_49 {dimension_numbers = #tpu.dot_dimension_numbers<[1], [0], [0], [1], [0, 0, 1, 1], [], []>} : vector<8x128xf32>, vector<128x32xf32>, vector<8x32xf32> -> vector<8x32xf32>
    %128 = vector.extract_strided_slice %0 {offsets = [5, 0], sizes = [1, 32], strides = [1, 1]} : vector<8x32xf32> to vector<1x32xf32>
    %129 = vector.broadcast %128 : vector<1x32xf32> to vector<8x32xf32>
    %130 = arith.addf %127, %129 : vector<8x32xf32>
    %131 = arith.addf %118, %130 : vector<8x32xf32>
    %132 = vector.extract_strided_slice %0 {offsets = [3, 0], sizes = [1, 32], strides = [1, 1]} : vector<8x32xf32> to vector<1x32xf32>
    %133 = vector.extract_strided_slice %0 {offsets = [4, 0], sizes = [1, 32], strides = [1, 1]} : vector<8x32xf32> to vector<1x32xf32>
    %cst_50 = arith.constant dense<0.000000e+00> : vector<8xf32>
    %134 = vector.multi_reduction <add>, %131, %cst_50 [1] : vector<8x32xf32> to vector<8xf32>
    %135 = vector.shape_cast %134 : vector<8xf32> to vector<8x1xf32>
    %cst_51 = arith.constant 3.200000e+01 : f32
    %136 = vector.broadcast %cst_51 : f32 to vector<8x1xf32>
    %137 = arith.divf %135, %136 : vector<8x1xf32>
    %138 = vector.broadcast %137 : vector<8x1xf32> to vector<8x32xf32>
    %139 = arith.subf %131, %138 : vector<8x32xf32>
    %140 = arith.mulf %139, %139 : vector<8x32xf32>
    %cst_52 = arith.constant dense<0.000000e+00> : vector<8xf32>
    %141 = vector.multi_reduction <add>, %140, %cst_52 [1] : vector<8x32xf32> to vector<8xf32>
    %142 = vector.shape_cast %141 : vector<8xf32> to vector<8x1xf32>
    %cst_53 = arith.constant 3.200000e+01 : f32
    %143 = vector.broadcast %cst_53 : f32 to vector<8x1xf32>
    %144 = arith.divf %142, %143 : vector<8x1xf32>
    %145 = vector.broadcast %137 : vector<8x1xf32> to vector<8x32xf32>
    %146 = arith.subf %131, %145 : vector<8x32xf32>
    %cst_54 = arith.constant 9.99999974E-6 : f32
    %147 = vector.broadcast %cst_54 : f32 to vector<8x1xf32>
    %148 = arith.addf %144, %147 : vector<8x1xf32>
    %149 = math.rsqrt %148 : vector<8x1xf32>
    %150 = vector.broadcast %149 : vector<8x1xf32> to vector<8x32xf32>
    %151 = arith.mulf %146, %150 : vector<8x32xf32>
    %152 = vector.broadcast %132 : vector<1x32xf32> to vector<8x32xf32>
    %153 = arith.mulf %151, %152 : vector<8x32xf32>
    %154 = vector.broadcast %133 : vector<1x32xf32> to vector<8x32xf32>
    %155 = arith.addf %153, %154 : vector<8x32xf32>
    %156 = vector.extract_strided_slice %0 {offsets = [6, 0], sizes = [1, 32], strides = [1, 1]} : vector<8x32xf32> to vector<1x32xf32>
    %157 = vector.broadcast %156 : vector<1x32xf32> to vector<8x32xf32>
    %158 = arith.mulf %155, %157 : vector<8x32xf32>
    %cst_55 = arith.constant dense<0.000000e+00> : vector<8xf32>
    %159 = vector.multi_reduction <add>, %158, %cst_55 [1] : vector<8x32xf32> to vector<8xf32>
    %160 = vector.shape_cast %159 : vector<8xf32> to vector<8x1xf32>
    %161 = vector.extract_strided_slice %0 {offsets = [7, 0], sizes = [1, 1], strides = [1, 1]} : vector<8x32xf32> to vector<1x1xf32>
    %162 = vector.broadcast %161 : vector<1x1xf32> to vector<8x1xf32>
    %163 = arith.addf %160, %162 : vector<8x1xf32>
    %164 = arith.negf %163 : vector<8x1xf32>
    %165 = math.exp %164 : vector<8x1xf32>
    %cst_56 = arith.constant 1.000000e+00 : f32
    %166 = vector.broadcast %cst_56 : f32 to vector<8x1xf32>
    %167 = arith.addf %166, %165 : vector<8x1xf32>
    %168 = arith.divf %166, %167 : vector<8x1xf32>
    %cst_57 = arith.constant 4.000000e-01 : f32
    %169 = vector.broadcast %cst_57 : f32 to vector<8x1xf32>
    %170 = arith.subf %168, %169 : vector<8x1xf32>
    %c0_58 = arith.constant 0 : index
    %c0_59 = arith.constant 0 : index
    %c0_60 = arith.constant 0 : index
    %171 = vector.load %arg11[%c0_58, %c0_59, %c0_60] : memref<1x8x1xf32, #tpu.memory_space<vmem>>, vector<1x8x1xf32>
    %172 = vector.shape_cast %171 : vector<1x8x1xf32> to vector<8x1xf32>
    %173 = vector.shape_cast %170 : vector<8x1xf32> to vector<1x8x1xf32>
    tpu.vector_store %arg11[%c0_58, %c0_59, %c0_60], %173 {strides = array<i32>} : memref<1x8x1xf32, #tpu.memory_space<vmem>>, vector<1x8x1xf32>,
    return
  }
  func.func @transform_0(%arg0: i32) -> (i32, i32, i32) {
    %c0_i32 = arith.constant 0 : i32
    %c0_i32_0 = arith.constant 0 : i32
    %c0_i32_1 = arith.constant 0 : i32
    return %arg0, %c0_i32, %c0_i32_0 : i32, i32, i32
  }
  func.func @transform_1(%arg0: i32) -> (i32, i32) {
    %c0_i32 = arith.constant 0 : i32
    %c0_i32_0 = arith.constant 0 : i32
    %c0_i32_1 = arith.constant 0 : i32
    return %c0_i32, %c0_i32_0 : i32, i32
  }
  func.func @transform_2(%arg0: i32) -> (i32, i32) {
    %c0_i32 = arith.constant 0 : i32
    %c0_i32_0 = arith.constant 0 : i32
    %c0_i32_1 = arith.constant 0 : i32
    return %c0_i32, %c0_i32_0 : i32, i32
  }
  func.func @transform_3(%arg0: i32) -> (i32, i32) {
    %c0_i32 = arith.constant 0 : i32
    %c0_i32_0 = arith.constant 0 : i32
    %c0_i32_1 = arith.constant 0 : i32
    return %c0_i32, %c0_i32_0 : i32, i32
  }
  func.func @transform_4(%arg0: i32) -> (i32, i32) {
    %c0_i32 = arith.constant 0 : i32
    %c0_i32_0 = arith.constant 0 : i32
    %c0_i32_1 = arith.constant 0 : i32
    return %c0_i32, %c0_i32_0 : i32, i32
  }
  func.func @transform_5(%arg0: i32) -> (i32, i32) {
    %c0_i32 = arith.constant 0 : i32
    %c0_i32_0 = arith.constant 0 : i32
    %c0_i32_1 = arith.constant 0 : i32
    return %c0_i32, %c0_i32_0 : i32, i32
  }
  func.func @transform_6(%arg0: i32) -> (i32, i32) {
    %c0_i32 = arith.constant 0 : i32
    %c0_i32_0 = arith.constant 0 : i32
    %c0_i32_1 = arith.constant 0 : i32
    return %c0_i32, %c0_i32_0 : i32, i32
  }
  func.func @transform_7(%arg0: i32) -> (i32, i32) {
    %c0_i32 = arith.constant 0 : i32
    %c0_i32_0 = arith.constant 0 : i32
    %c0_i32_1 = arith.constant 0 : i32
    return %c0_i32, %c0_i32_0 : i32, i32
  }
  func.func @transform_8(%arg0: i32) -> (i32, i32) {
    %c0_i32 = arith.constant 0 : i32
    %c0_i32_0 = arith.constant 0 : i32
    %c0_i32_1 = arith.constant 0 : i32
    return %c0_i32, %c0_i32_0 : i32, i32
  }
  func.func @transform_9(%arg0: i32) -> (i32, i32) {
    %c0_i32 = arith.constant 0 : i32
    %c0_i32_0 = arith.constant 0 : i32
    %c0_i32_1 = arith.constant 0 : i32
    return %c0_i32, %c0_i32_0 : i32, i32
  }
  func.func @transform_10(%arg0: i32) -> (i32, i32, i32) {
    %c0_i32 = arith.constant 0 : i32
    %c0_i32_0 = arith.constant 0 : i32
    %c0_i32_1 = arith.constant 0 : i32
    return %arg0, %c0_i32, %c0_i32_0 : i32, i32, i32
  }
}

</mosaic_0001>

<llo_original>
// kernel: transformer_forward.1
$region0: #{transformer_forward.1}
  #allocation0 [shape = 'u32[]', space=smem, size = 0x4, offset = 0x4, fixed_abs, tag = 'smem constant byte address 0x4 - core index']
  #allocation1 [shape = 'u32[72,128]{1,0:T(1,128)}', space=vmem, size = 0x9000, scoped, tag = 'internal scratch']
  %s0 = inlined_call_operand.vmem [shape: f32[2,8,16], index: 0, kind: input, shape index: {}]
  %s1 = inlined_call_operand.vmem [shape: f32[8,32], index: 1, kind: input, shape index: {}]
  %s2 = inlined_call_operand.vmem [shape: f32[16,32], index: 2, kind: input, shape index: {}]
  %s3 = inlined_call_operand.vmem [shape: f32[32,96], index: 3, kind: input, shape index: {}]
  %s4 = inlined_call_operand.vmem [shape: f32[1,96], index: 4, kind: input, shape index: {}]
  %s5 = inlined_call_operand.vmem [shape: f32[32,32], index: 5, kind: input, shape index: {}]
  %s6 = inlined_call_operand.vmem [shape: f32[32,128], index: 6, kind: input, shape index: {}]
  %s7 = inlined_call_operand.vmem [shape: f32[1,128], index: 7, kind: input, shape index: {}]
  %s8 = inlined_call_operand.vmem [shape: f32[128,32], index: 8, kind: input, shape index: {}]
  %s9 = inlined_call_operand.vmem [shape: f32[8,32], index: 9, kind: input, shape index: {}]
  %s10 = inlined_call_operand.vmem [shape: f32[2,8,1], index: 10, kind: output, shape index: {}]
  %s11 = sld [smem:[#allocation0]]
  $region73: #{transformer_forward.1} parent=0
    _
  %s13 = ssub.s32 1, %s11
  %s14 = scalar_select 0, %s13, %s11
  loop: start=0, step=1, limit=4
  $region2: #{transformer_forward.1} parent=0 // loop_pre_header
    _
  $region3: #{transformer_forward.1} parent=0 // loop_header
    %s16 = sphi 0, %s20
    %p17 = scmp.ge.s32.totalorder %s16, 4
    %s26 = sphi 0, %s28
    %s29 = sphi 0, %s26
    %s30 = sphi 0, %s29
    %s46 = sphi 0, %s30
    %s50 = sphi 0, %s50
    %s52 = sphi 0, %s50
    %s53 = sphi 0, %s52
    %s67 = sphi 0, %s53
    %s71 = sphi 0, %s71
    %s73 = sphi 0, %s71
    %s74 = sphi 0, %s73
    %s88 = sphi 0, %s74
    %s92 = sphi 0, %s92
    %s94 = sphi 0, %s92
    %s95 = sphi 0, %s94
    %s109 = sphi 0, %s95
    %s113 = sphi 0, %s113
    %s115 = sphi 0, %s113
    %s116 = sphi 0, %s115
    %s130 = sphi 0, %s116
    %s134 = sphi 0, %s134
    %s136 = sphi 0, %s134
    %s137 = sphi 0, %s136
    %s151 = sphi 0, %s137
    %s155 = sphi 0, %s155
    %s157 = sphi 0, %s155
    %s158 = sphi 0, %s157
    %s172 = sphi 0, %s158
    %s176 = sphi 0, %s176
    %s178 = sphi 0, %s176
    %s179 = sphi 0, %s178
    %s193 = sphi 0, %s179
    %s197 = sphi 0, %s197
    %s199 = sphi 0, %s197
    %s200 = sphi 0, %s199
    %s214 = sphi 0, %s200
    %s218 = sphi 0, %s218
    %s220 = sphi 0, %s218
    %s221 = sphi 0, %s220
    %s235 = sphi 0, %s221
    %s241 = sphi 0, %s243
    %s244 = sphi 0, %s241
    %s245 = sphi 0, %s244
    %s261 = sphi 0, %s245
  $region4: #{transformer_forward.1} parent=0 // loop_header_branch
    %19 = sbr.rel (%p17) target = $region8
  $region5: #{transformer_forward.1} parent=0 // loop_body
    %s21 = ssub.s32 %s16, 1
    %s22 = ssub.s32 %s16, 2
    %s23 = sadd.s32 %s16, 1
    %s24 = ssub.s32 %s16, %s23
    %p25 = scmp.eq.s32.totalorder %s24, 0
    %s27 = sadd.s32 %s26, 1
    %s28 = scalar_select %p25, %s26, %s27
    %p31 = pneg %p25
    %p32 = scmp.eq.s32.totalorder %s16, 1
    %p33 = por %p31, %p32
    %p34 = scmp.ne.s32.totalorder %s26, %s29
    %p35 = scmp.eq.s32.totalorder %s16, 0
    %p36 = por %p34, %p35
    %p37 = scmp.ne.s32.totalorder %s26, %s29
    %p38 = scmp.eq.s32.totalorder %s21, 1
    %p39 = por %p37, %p38
    %p40 = scmp.ne.s32.totalorder %s29, %s30
    %p41 = scmp.eq.s32.totalorder %s21, 0
    %p42 = por %p40, %p41
    %p43 = scmp.ne.s32.totalorder %s29, %s30
    %p44 = scmp.eq.s32.totalorder %s22, 1
    %p45 = por %p43, %p44
    %p47 = scmp.ne.s32.totalorder %s30, %s46
    %p48 = scmp.eq.s32.totalorder %s22, 0
    %p49 = por %p47, %p48
    %s51 = sadd.s32 %s50, 1
    %p54 = scmp.eq.s32.totalorder %s16, 1
    %p55 = scmp.ne.s32.totalorder %s50, %s52
    %p56 = scmp.eq.s32.totalorder %s16, 0
    %p57 = por %p55, %p56
    %p58 = scmp.ne.s32.totalorder %s50, %s52
    %p59 = scmp.eq.s32.totalorder %s21, 1
    %p60 = por %p58, %p59
    %p61 = scmp.ne.s32.totalorder %s52, %s53
    %p62 = scmp.eq.s32.totalorder %s21, 0
    %p63 = por %p61, %p62
    %p64 = scmp.ne.s32.totalorder %s52, %s53
    %p65 = scmp.eq.s32.totalorder %s22, 1
    %p66 = por %p64, %p65
    %p68 = scmp.ne.s32.totalorder %s53, %s67
    %p69 = scmp.eq.s32.totalorder %s22, 0
    %p70 = por %p68, %p69
    %s72 = sadd.s32 %s71, 1
    %p75 = scmp.eq.s32.totalorder %s16, 1
    %p76 = scmp.ne.s32.totalorder %s71, %s73
    %p77 = scmp.eq.s32.totalorder %s16, 0
    %p78 = por %p76, %p77
    %p79 = scmp.ne.s32.totalorder %s71, %s73
    %p80 = scmp.eq.s32.totalorder %s21, 1
    %p81 = por %p79, %p80
    %p82 = scmp.ne.s32.totalorder %s73, %s74
    %p83 = scmp.eq.s32.totalorder %s21, 0
    %p84 = por %p82, %p83
    %p85 = scmp.ne.s32.totalorder %s73, %s74
    %p86 = scmp.eq.s32.totalorder %s22, 1
    %p87 = por %p85, %p86
    %p89 = scmp.ne.s32.totalorder %s74, %s88
    %p90 = scmp.eq.s32.totalorder %s22, 0
    %p91 = por %p89, %p90
    %s93 = sadd.s32 %s92, 1
    %p96 = scmp.eq.s32.totalorder %s16, 1
    %p97 = scmp.ne.s32.totalorder %s92, %s94
    %p98 = scmp.eq.s32.totalorder %s16, 0
    %p99 = por %p97, %p98
    %p100 = scmp.ne.s32.totalorder %s92, %s94
    %p101 = scmp.eq.s32.totalorder %s21, 1
    %p102 = por %p100, %p101
    %p103 = scmp.ne.s32.totalorder %s94, %s95
    %p104 = scmp.eq.s32.totalorder %s21, 0
    %p105 = por %p103, %p104
    %p106 = scmp.ne.s32.totalorder %s94, %s95
    %p107 = scmp.eq.s32.totalorder %s22, 1
    %p108 = por %p106, %p107
    %p110 = scmp.ne.s32.totalorder %s95, %s109
    %p111 = scmp.eq.s32.totalorder %s22, 0
    %p112 = por %p110, %p111
    %s114 = sadd.s32 %s113, 1
    %p117 = scmp.eq.s32.totalorder %s16, 1
    %p118 = scmp.ne.s32.totalorder %s113, %s115
    %p119 = scmp.eq.s32.totalorder %s16, 0
    %p120 = por %p118, %p119
    %p121 = scmp.ne.s32.totalorder %s113, %s115
    %p122 = scmp.eq.s32.totalorder %s21, 1
    %p123 = por %p121, %p122
    %p124 = scmp.ne.s32.totalorder %s115, %s116
    %p125 = scmp.eq.s32.totalorder %s21, 0
    %p126 = por %p124, %p125
    %p127 = scmp.ne.s32.totalorder %s115, %s116
    %p128 = scmp.eq.s32.totalorder %s22, 1
    %p129 = por %p127, %p128
    %p131 = scmp.ne.s32.totalorder %s116, %s130
    %p132 = scmp.eq.s32.totalorder %s22, 0
    %p133 = por %p131, %p132
    %s135 = sadd.s32 %s134, 1
    %p138 = scmp.eq.s32.totalorder %s16, 1
    %p139 = scmp.ne.s32.totalorder %s134, %s136
    %p140 = scmp.eq.s32.totalorder %s16, 0
    %p141 = por %p139, %p140
    %p142 = scmp.ne.s32.totalorder %s134, %s136
    %p143 = scmp.eq.s32.totalorder %s21, 1
    %p144 = por %p142, %p143
    %p145 = scmp.ne.s32.totalorder %s136, %s137
    %p146 = scmp.eq.s32.totalorder %s21, 0
    %p147 = por %p145, %p146
    %p148 = scmp.ne.s32.totalorder %s136, %s137
    %p149 = scmp.eq.s32.totalorder %s22, 1
    %p150 = por %p148, %p149
    %p152 = scmp.ne.s32.totalorder %s137, %s151
    %p153 = scmp.eq.s32.totalorder %s22, 0
    %p154 = por %p152, %p153
    %s156 = sadd.s32 %s155, 1
    %p159 = scmp.eq.s32.totalorder %s16, 1
    %p160 = scmp.ne.s32.totalorder %s155, %s157
    %p161 = scmp.eq.s32.totalorder %s16, 0
    %p162 = por %p160, %p161
    %p163 = scmp.ne.s32.totalorder %s155, %s157
    %p164 = scmp.eq.s32.totalorder %s21, 1
    %p165 = por %p163, %p164
    %p166 = scmp.ne.s32.totalorder %s157, %s158
    %p167 = scmp.eq.s32.totalorder %s21, 0
    %p168 = por %p166, %p167
    %p169 = scmp.ne.s32.totalorder %s157, %s158
    %p170 = scmp.eq.s32.totalorder %s22, 1
    %p171 = por %p169, %p170
    %p173 = scmp.ne.s32.totalorder %s158, %s172
    %p174 = scmp.eq.s32.totalorder %s22, 0
    %p175 = por %p173, %p174
    %s177 = sadd.s32 %s176, 1
    %p180 = scmp.eq.s32.totalorder %s16, 1
    %p181 = scmp.ne.s32.totalorder %s176, %s178
    %p182 = scmp.eq.s32.totalorder %s16, 0
    %p183 = por %p181, %p182
    %p184 = scmp.ne.s32.totalorder %s176, %s178
    %p185 = scmp.eq.s32.totalorder %s21, 1
    %p186 = por %p184, %p185
    %p187 = scmp.ne.s32.totalorder %s178, %s179
    %p188 = scmp.eq.s32.totalorder %s21, 0
    %p189 = por %p187, %p188
    %p190 = scmp.ne.s32.totalorder %s178, %s179
    %p191 = scmp.eq.s32.totalorder %s22, 1
    %p192 = por %p190, %p191
    %p194 = scmp.ne.s32.totalorder %s179, %s193
    %p195 = scmp.eq.s32.totalorder %s22, 0
    %p196 = por %p194, %p195
    %s198 = sadd.s32 %s197, 1
    %p201 = scmp.eq.s32.totalorder %s16, 1
    %p202 = scmp.ne.s32.totalorder %s197, %s199
    %p203 = scmp.eq.s32.totalorder %s16, 0
    %p204 = por %p202, %p203
    %p205 = scmp.ne.s32.totalorder %s197, %s199
    %p206 = scmp.eq.s32.totalorder %s21, 1
    %p207 = por %p205, %p206
    %p208 = scmp.ne.s32.totalorder %s199, %s200
    %p209 = scmp.eq.s32.totalorder %s21, 0
    %p210 = por %p208, %p209
    %p211 = scmp.ne.s32.totalorder %s199, %s200
    %p212 = scmp.eq.s32.totalorder %s22, 1
    %p213 = por %p211, %p212
    %p215 = scmp.ne.s32.totalorder %s200, %s214
    %p216 = scmp.eq.s32.totalorder %s22, 0
    %p217 = por %p215, %p216
    %s219 = sadd.s32 %s218, 1
    %p222 = scmp.eq.s32.totalorder %s16, 1
    %p223 = scmp.ne.s32.totalorder %s218, %s220
    %p224 = scmp.eq.s32.totalorder %s16, 0
    %p225 = por %p223, %p224
    %p226 = scmp.ne.s32.totalorder %s218, %s220
    %p227 = scmp.eq.s32.totalorder %s21, 1
    %p228 = por %p226, %p227
    %p229 = scmp.ne.s32.totalorder %s220, %s221
    %p230 = scmp.eq.s32.totalorder %s21, 0
    %p231 = por %p229, %p230
    %p232 = scmp.ne.s32.totalorder %s220, %s221
    %p233 = scmp.eq.s32.totalorder %s22, 1
    %p234 = por %p232, %p233
    %p236 = scmp.ne.s32.totalorder %s221, %s235
    %p237 = scmp.eq.s32.totalorder %s22, 0
    %p238 = por %p236, %p237
    %s239 = ssub.s32 %s16, %s23
    %p240 = scmp.eq.s32.totalorder %s239, 0
    %s242 = sadd.s32 %s241, 1
    %s243 = scalar_select %p240, %s241, %s242
    %p246 = pneg %p240
    %p247 = scmp.eq.s32.totalorder %s16, 1
    %p248 = por %p246, %p247
    %p249 = scmp.ne.s32.totalorder %s241, %s244
    %p250 = scmp.eq.s32.totalorder %s16, 0
    %p251 = por %p249, %p250
    %p252 = scmp.ne.s32.totalorder %s241, %s244
    %p253 = scmp.eq.s32.totalorder %s21, 1
    %p254 = por %p252, %p253
    %p255 = scmp.ne.s32.totalorder %s244, %s245
    %p256 = scmp.eq.s32.totalorder %s21, 0
    %p257 = por %p255, %p256
    %p258 = scmp.ne.s32.totalorder %s244, %s245
    %p259 = scmp.eq.s32.totalorder %s22, 1
    %p260 = por %p258, %p259
    %p262 = scmp.ne.s32.totalorder %s245, %s261
    %p263 = scmp.eq.s32.totalorder %s22, 0
    %p264 = por %p262, %p263
    %p265 = scmp.le.s32.totalorder 1, %s16
    %p266 = scmp.lt.s32.totalorder %s16, 3
    %p267 = pnand %p265, %p266
    %p268 = pneg %p267
    // Predicated region
    $region9: #{transformer_forward.1} parent=5 // pred_check
      _
    $region10: #{transformer_forward.1} parent=5 // pred_check_branch
      %270 = sbr.rel (%p267) target = $region12
    $region11: #{transformer_forward.1} parent=5 // pred_region
      %s271 = ssub.s32 %s16, 1
      // Predicated region
      $region13: #{transformer_forward.1} parent=11 // pred_check
        %p272 = pneg %p63
      $region14: #{transformer_forward.1} parent=11 // pred_check_branch
        %274 = sbr.rel (%p272) target = $region16
      $region15: #{transformer_forward.1} parent=11 // pred_region
        _
      $region16: #{transformer_forward.1} parent=11 // pred_fallthru
        _
      // Predicated region
      $region17: #{transformer_forward.1} parent=11 // pred_check
        %p275 = pneg %p84
      $region18: #{transformer_forward.1} parent=11 // pred_check_branch
        %277 = sbr.rel (%p275) target = $region20
      $region19: #{transformer_forward.1} parent=11 // pred_region
        _
      $region20: #{transformer_forward.1} parent=11 // pred_fallthru
        _
      // Predicated region
      $region21: #{transformer_forward.1} parent=11 // pred_check
        %p278 = pneg %p105
      $region22: #{transformer_forward.1} parent=11 // pred_check_branch
        %280 = sbr.rel (%p278) target = $region24
      $region23: #{transformer_forward.1} parent=11 // pred_region
        _
      $region24: #{transformer_forward.1} parent=11 // pred_fallthru
        _
      // Predicated region
      $region25: #{transformer_forward.1} parent=11 // pred_check
        %p281 = pneg %p126
      $region26: #{transformer_forward.1} parent=11 // pred_check_branch
        %283 = sbr.rel (%p281) target = $region28
      $region27: #{transformer_forward.1} parent=11 // pred_region
        _
      $region28: #{transformer_forward.1} parent=11 // pred_fallthru
        _
      // Predicated region
      $region29: #{transformer_forward.1} parent=11 // pred_check
        %p284 = pneg %p147
      $region30: #{transformer_forward.1} parent=11 // pred_check_branch
        %286 = sbr.rel (%p284) target = $region32
      $region31: #{transformer_forward.1} parent=11 // pred_region
        _
      $region32: #{transformer_forward.1} parent=11 // pred_fallthru
        _
      // Predicated region
      $region33: #{transformer_forward.1} parent=11 // pred_check
        %p287 = pneg %p168
      $region34: #{transformer_forward.1} parent=11 // pred_check_branch
        %289 = sbr.rel (%p287) target = $region36
      $region35: #{transformer_forward.1} parent=11 // pred_region
        _
      $region36: #{transformer_forward.1} parent=11 // pred_fallthru
        _
      // Predicated region
      $region37: #{transformer_forward.1} parent=11 // pred_check
        %p290 = pneg %p189
      $region38: #{transformer_forward.1} parent=11 // pred_check_branch
        %292 = sbr.rel (%p290) target = $region40
      $region39: #{transformer_forward.1} parent=11 // pred_region
        _
      $region40: #{transformer_forward.1} parent=11 // pred_fallthru
        _
      // Predicated region
      $region41: #{transformer_forward.1} parent=11 // pred_check
        %p293 = pneg %p210
      $region42: #{transformer_forward.1} parent=11 // pred_check_branch
        %295 = sbr.rel (%p293) target = $region44
      $region43: #{transformer_forward.1} parent=11 // pred_region
        _
      $region44: #{transformer_forward.1} parent=11 // pred_fallthru
        _
      // Predicated region
      $region45: #{transformer_forward.1} parent=11 // pred_check
        %p296 = pneg %p231
      $region46: #{transformer_forward.1} parent=11 // pred_check_branch
        %298 = sbr.rel (%p296) target = $region48
      $region47: #{transformer_forward.1} parent=11 // pred_region
        _
      $region48: #{transformer_forward.1} parent=11 // pred_fallthru
        _
    $region12: #{transformer_forward.1} parent=5 // pred_fallthru
      _
    %p299 = scmp.lt.s32.totalorder %s16, 2
    // Predicated region
    $region49: #{transformer_forward.1} parent=5 // pred_check
      %p300 = pneg %p299
    $region50: #{transformer_forward.1} parent=5 // pred_check_branch
      %302 = sbr.rel (%p300) target = $region52
    $region51: #{transformer_forward.1} parent=5 // pred_region
      // Predicated region
      $region53: #{transformer_forward.1} parent=51 // pred_check
        %p303 = pneg %p36
      $region54: #{transformer_forward.1} parent=51 // pred_check_branch
        %305 = sbr.rel (%p303) target = $region56
      $region55: #{transformer_forward.1} parent=51 // pred_region
        %p306 = scmp.lt.s32.totalorder %s16, 1
        %s307 = scalar_select %p306, %s16, 1
        %s308 = smul.addr %s307, 8
        %s309 = scalar_lea.vmem %s0, %s308
      $region56: #{transformer_forward.1} parent=51 // pred_fallthru
        _
    $region52: #{transformer_forward.1} parent=5 // pred_fallthru
      _
    %p310 = scmp.le.s32.totalorder 1, %s16
    %p311 = scmp.lt.s32.totalorder %s16, 3
    %p312 = pnand %p310, %p311
    %p313 = pneg %p312
    // Predicated region
    $region57: #{transformer_forward.1} parent=5 // pred_check
      _
    $region58: #{transformer_forward.1} parent=5 // pred_check_branch
      %315 = sbr.rel (%p312) target = $region60
    $region59: #{transformer_forward.1} parent=5 // pred_region
      %s316 = ssub.s32 %s16, 1
      %p317 = scmp.lt.s32.totalorder %s21, 1
      %s318 = scalar_select %p317, %s21, 1
      %s319 = smul.addr %s318, 8
      %s320 = scalar_lea.vmem %s0, %s319
      %p321 = pneg %p42
      %p322 = pneg %p39
      %p323 = pneg %p63
      %p324 = pneg %p60
      %p325 = pneg %p84
      %p326 = pneg %p81
      %p327 = pneg %p105
      %p328 = pneg %p102
      %p329 = pneg %p126
      %p330 = pneg %p123
      %p331 = pneg %p147
      %p332 = pneg %p144
      %p333 = pneg %p168
      %p334 = pneg %p165
      %p335 = pneg %p189
      %p336 = pneg %p186
      %p337 = pneg %p210
      %p338 = pneg %p207
      %p339 = pneg %p231
      %p340 = pneg %p228
      %p341 = pneg %p257
      %p342 = pneg %p254
      %p343 = scmp.lt.s32.totalorder %s21, 1
      %s344 = scalar_select %p343, %s21, 1
      %s345 = smul.addr %s344, 8
      %s346 = scalar_lea.vmem %s10, %s345
      %p347 = scmp.lt.s32.totalorder %s21, 1
      %s348 = scalar_select %p347, %s21, 1
      %s349 = smul.addr %s348, 8
      %s350 = scalar_lea.vmem %s0, %s349
      %p351 = scmp.lt.s32.totalorder %s21, 1
      %s352 = scalar_select %p351, %s21, 1
      %s353 = smul.addr %s352, 8
      %s354 = scalar_lea.vmem %s10, %s353
      %v355 = vld [vmem:[%s9] sm:$0xff]
      %v356 = vld [vmem:[%s350] sm:$0xff]
      %v357 = vld [vmem:[%s2] sm:$0xff]
      %v358 = vld [vmem:[%s2 + $0x8] sm:$0xff]
      %v359 = vld [vmem:[%s1] sm:$0xff]
      %vm360 = vcmask 130048
      %v362 = vsel %vm360, %v356, 0
      %364 = vmatpush.msra.mxu0 0.0
      %365 = vmatpush.msra.mxu0 0.0
      %366 = vmatpush.msra.mxu0 0.0
      %367 = vmatpush.msra.mxu0 0.0
      %368 = vmatpush.msra.mxu0 0.0
      %369 = vmatpush.msra.mxu0 0.0
      %370 = vmatpush.msra.mxu0 0.0
      %371 = vmatpush.msra.mxu0 0.0
      %372 = vmatpush.msra.mxu0 0.0
      %373 = vmatpush.msra.mxu0 0.0
      %374 = vmatpush.msra.mxu0 0.0
      %375 = vmatpush.msra.mxu0 0.0
      %376 = vmatpush.msra.mxu0 0.0
      %377 = vmatpush.msra.mxu0 0.0
      %378 = vmatpush.msra.mxu0 %v358
      %379 = vmatpush.msra.mxu0 %v357
      %380 = vmatmul.f32.gmra.mxu0 %v362
      %v381 = vpop.f32.mrf.mxu0
      %v382 = vadd.f32 %v359, %v381
      %383 = vdwg.mxu0
      %v384 = vld [vmem:[%s3] sm:$0xff]
      %v385 = vld [vmem:[%s3 + $0x8] sm:$0xff]
      %v386 = vld [vmem:[%s3 + $0x10] sm:$0xff]
      %v387 = vld [vmem:[%s3 + $0x18] sm:$0xff]
      %v388 = vld [vmem:[%s4] sm:$0x1]
      %v390 = vperm.slane %v388, 0
      %vm392 = vcmask 261120
      %v394 = vsel %vm392, %v382, 0
      %396 = vmatpush.msra.mxu0 0.0
      %397 = vmatpush.msra.mxu0 0.0
      %398 = vmatpush.msra.mxu0 0.0
      %399 = vmatpush.msra.mxu0 0.0
      %400 = vmatpush.msra.mxu0 0.0
      %401 = vmatpush.msra.mxu0 0.0
      %402 = vmatpush.msra.mxu0 0.0
      %403 = vmatpush.msra.mxu0 0.0
      %404 = vmatpush.msra.mxu0 0.0
      %405 = vmatpush.msra.mxu0 0.0
      %406 = vmatpush.msra.mxu0 0.0
      %407 = vmatpush.msra.mxu0 0.0
      %408 = vmatpush.msra.mxu0 %v387
      %409 = vmatpush.msra.mxu0 %v386
      %410 = vmatpush.msra.mxu0 %v385
      %411 = vmatpush.msra.mxu0 %v384
      %412 = vmatmul.f32.gmra.mxu0 %v394
      %v413 = vpop.f32.mrf.mxu0
      %v414 = vadd.f32 %v390, %v413
      %415 = vdwg.mxu0
      %417 = vrot.lane.b32.xlu0 %v414, 96
      %v418 = vpop.permute.xlu0 %417
      %vm419 = vcmask 64512
      %v420 = vsel %vm419, %v414, 0
      %v422 = vsel %vm419, %v418, 0
      %424 = vmatpush.xpose.msra.mxu0 0.0
      %425 = vmatpush.xpose.msra.mxu0 0.0
      %426 = vmatpush.xpose.msra.mxu0 0.0
      %427 = vmatpush.xpose.msra.mxu0 0.0
      %428 = vmatpush.xpose.msra.mxu0 0.0
      %429 = vmatpush.xpose.msra.mxu0 0.0
      %430 = vmatpush.xpose.msra.mxu0 0.0
      %431 = vmatpush.xpose.msra.mxu0 0.0
      %432 = vmatpush.xpose.msra.mxu0 0.0
      %433 = vmatpush.xpose.msra.mxu0 0.0
      %434 = vmatpush.xpose.msra.mxu0 0.0
      %435 = vmatpush.xpose.msra.mxu0 0.0
      %436 = vmatpush.xpose.msra.mxu0 0.0
      %437 = vmatpush.xpose.msra.mxu0 0.0
      %438 = vmatpush.xpose.msra.mxu0 0.0
      %439 = vmatpush.xpose.msra.mxu0 %v422
      %440 = vmatmul.f32.gmra.mxu0 %v420
      %v441 = vpop.f32.mrf.mxu0
      %v442 = vadd.f32 0.0, %v441
      %443 = vdwg.mxu0
      %v444 = vsel %vm419, %v442, -inf
      %445 = vmax.xlane.f32.xlu0 %v444
      %v446 = vpop.xlane.xlu0 %445
      %v447 = vsub.f32 %v442, %v446
      %v448 = vmul.f32 %v447, 1.442695
      %v449 = vpow.pop %v448
      %v450 = vsel %vm419, %v449, 0.0
      %451 = vadd.xlane.f32.xlu0 %v450
      %v452 = vpop.xlane.xlu0 %451
      %v453 = vrcp.pop %v452
      %v454 = vmul.f32 %v452, %v453
      %v455 = vsub.f32 2.0, %v454
      %v456 = vmul.f32 %v453, %v455
      %v457 = vmul.f32 %v449, %v456
      %458 = vrot.lane.b32.xlu0 %v414, 64
      %v459 = vpop.permute.xlu0 %458
      %v462 = vsel %vm419, %v457, 0
      %464 = vmatpush.msra.mxu0 0.0
      %465 = vmatpush.msra.mxu0 0.0
      %466 = vmatpush.msra.mxu0 0.0
      %467 = vmatpush.msra.mxu0 0.0
      %468 = vmatpush.msra.mxu0 0.0
      %469 = vmatpush.msra.mxu0 0.0
      %470 = vmatpush.msra.mxu0 0.0
      %471 = vmatpush.msra.mxu0 0.0
      %472 = vmatpush.msra.mxu0 0.0
      %473 = vmatpush.msra.mxu0 0.0
      %474 = vmatpush.msra.mxu0 0.0
      %475 = vmatpush.msra.mxu0 0.0
      %476 = vmatpush.msra.mxu0 0.0
      %477 = vmatpush.msra.mxu0 0.0
      %478 = vmatpush.msra.mxu0 0.0
      %479 = vmatpush.msra.mxu0 %v459
      %480 = vmatmul.f32.gmra.mxu0 %v462
      %v481 = vpop.f32.mrf.mxu0
      %v482 = vadd.f32 0.0, %v481
      %483 = vdwg.mxu0
      %484 = vrot.lane.b32.xlu0 %v414, 120
      %v485 = vpop.permute.xlu0 %484
      %486 = vrot.lane.b32.xlu0 %v414, 88
      %v487 = vpop.permute.xlu0 %486
      %v488 = vsel %vm419, %v485, 0
      %v490 = vsel %vm419, %v487, 0
      %492 = vmatpush.xpose.msra.mxu0 0.0
      %493 = vmatpush.xpose.msra.mxu0 0.0
      %494 = vmatpush.xpose.msra.mxu0 0.0
      %495 = vmatpush.xpose.msra.mxu0 0.0
      %496 = vmatpush.xpose.msra.mxu0 0.0
      %497 = vmatpush.xpose.msra.mxu0 0.0
      %498 = vmatpush.xpose.msra.mxu0 0.0
      %499 = vmatpush.xpose.msra.mxu0 0.0
      %500 = vmatpush.xpose.msra.mxu0 0.0
      %501 = vmatpush.xpose.msra.mxu0 0.0
      %502 = vmatpush.xpose.msra.mxu0 0.0
      %503 = vmatpush.xpose.msra.mxu0 0.0
      %504 = vmatpush.xpose.msra.mxu0 0.0
      %505 = vmatpush.xpose.msra.mxu0 0.0
      %506 = vmatpush.xpose.msra.mxu0 0.0
      %507 = vmatpush.xpose.msra.mxu0 %v490
      %508 = vmatmul.f32.gmra.mxu0 %v488
      %v509 = vpop.f32.mrf.mxu0
      %v510 = vadd.f32 0.0, %v509
      %511 = vdwg.mxu0
      %v512 = vsel %vm419, %v510, -inf
      %513 = vmax.xlane.f32.xlu0 %v512
      %v514 = vpop.xlane.xlu0 %513
      %v515 = vsub.f32 %v510, %v514
      %v516 = vmul.f32 %v515, 1.442695
      %v517 = vpow.pop %v516
      %v518 = vsel %vm419, %v517, 0.0
      %519 = vadd.xlane.f32.xlu0 %v518
      %v520 = vpop.xlane.xlu0 %519
      %v521 = vrcp.pop %v520
      %v522 = vmul.f32 %v520, %v521
      %v523 = vsub.f32 2.0, %v522
      %v524 = vmul.f32 %v521, %v523
      %v525 = vmul.f32 %v517, %v524
      %526 = vrot.lane.b32.xlu0 %v414, 56
      %v527 = vpop.permute.xlu0 %526
      %v530 = vsel %vm419, %v525, 0
      %532 = vmatpush.msra.mxu0 0.0
      %533 = vmatpush.msra.mxu0 0.0
      %534 = vmatpush.msra.mxu0 0.0
      %535 = vmatpush.msra.mxu0 0.0
      %536 = vmatpush.msra.mxu0 0.0
      %537 = vmatpush.msra.mxu0 0.0
      %538 = vmatpush.msra.mxu0 0.0
      %539 = vmatpush.msra.mxu0 0.0
      %540 = vmatpush.msra.mxu0 0.0
      %541 = vmatpush.msra.mxu0 0.0
      %542 = vmatpush.msra.mxu0 0.0
      %543 = vmatpush.msra.mxu0 0.0
      %544 = vmatpush.msra.mxu0 0.0
      %545 = vmatpush.msra.mxu0 0.0
      %546 = vmatpush.msra.mxu0 0.0
      %547 = vmatpush.msra.mxu0 %v527
      %548 = vmatmul.f32.gmra.mxu0 %v530
      %v549 = vpop.f32.mrf.mxu0
      %v550 = vadd.f32 0.0, %v549
      %551 = vdwg.mxu0
      %552 = vrot.lane.b32.xlu0 %v414, 112
      %v553 = vpop.permute.xlu0 %552
      %554 = vrot.lane.b32.xlu0 %v414, 80
      %v555 = vpop.permute.xlu0 %554
      %v556 = vsel %vm419, %v553, 0
      %v558 = vsel %vm419, %v555, 0
      %560 = vmatpush.xpose.msra.mxu0 0.0
      %561 = vmatpush.xpose.msra.mxu0 0.0
      %562 = vmatpush.xpose.msra.mxu0 0.0
      %563 = vmatpush.xpose.msra.mxu0 0.0
      %564 = vmatpush.xpose.msra.mxu0 0.0
      %565 = vmatpush.xpose.msra.mxu0 0.0
      %566 = vmatpush.xpose.msra.mxu0 0.0
      %567 = vmatpush.xpose.msra.mxu0 0.0
      %568 = vmatpush.xpose.msra.mxu0 0.0
      %569 = vmatpush.xpose.msra.mxu0 0.0
      %570 = vmatpush.xpose.msra.mxu0 0.0
      %571 = vmatpush.xpose.msra.mxu0 0.0
      %572 = vmatpush.xpose.msra.mxu0 0.0
      %573 = vmatpush.xpose.msra.mxu0 0.0
      %574 = vmatpush.xpose.msra.mxu0 0.0
      %575 = vmatpush.xpose.msra.mxu0 %v558
      %576 = vmatmul.f32.gmra.mxu0 %v556
      %v577 = vpop.f32.mrf.mxu0
      %v578 = vadd.f32 0.0, %v577
      %579 = vdwg.mxu0
      %v580 = vsel %vm419, %v578, -inf
      %581 = vmax.xlane.f32.xlu0 %v580
      %v582 = vpop.xlane.xlu0 %581
      %v583 = vsub.f32 %v578, %v582
      %v584 = vmul.f32 %v583, 1.442695
      %v585 = vpow.pop %v584
      %v586 = vsel %vm419, %v585, 0.0
      %587 = vadd.xlane.f32.xlu0 %v586
      %v588 = vpop.xlane.xlu0 %587
      %v589 = vrcp.pop %v588
      %v590 = vmul.f32 %v588, %v589
      %v591 = vsub.f32 2.0, %v590
      %v592 = vmul.f32 %v589, %v591
      %v593 = vmul.f32 %v585, %v592
      %594 = vrot.lane.b32.xlu0 %v414, 48
      %v595 = vpop.permute.xlu0 %594
      %v598 = vsel %vm419, %v593, 0
      %600 = vmatpush.msra.mxu0 0.0
      %601 = vmatpush.msra.mxu0 0.0
      %602 = vmatpush.msra.mxu0 0.0
      %603 = vmatpush.msra.mxu0 0.0
      %604 = vmatpush.msra.mxu0 0.0
      %605 = vmatpush.msra.mxu0 0.0
      %606 = vmatpush.msra.mxu0 0.0
      %607 = vmatpush.msra.mxu0 0.0
      %608 = vmatpush.msra.mxu0 0.0
      %609 = vmatpush.msra.mxu0 0.0
      %610 = vmatpush.msra.mxu0 0.0
      %611 = vmatpush.msra.mxu0 0.0
      %612 = vmatpush.msra.mxu0 0.0
      %613 = vmatpush.msra.mxu0 0.0
      %614 = vmatpush.msra.mxu0 0.0
      %615 = vmatpush.msra.mxu0 %v595
      %616 = vmatmul.f32.gmra.mxu0 %v598
      %v617 = vpop.f32.mrf.mxu0
      %v618 = vadd.f32 0.0, %v617
      %619 = vdwg.mxu0
      %620 = vrot.lane.b32.xlu0 %v414, 104
      %v621 = vpop.permute.xlu0 %620
      %622 = vrot.lane.b32.xlu0 %v414, 72
      %v623 = vpop.permute.xlu0 %622
      %v624 = vsel %vm419, %v621, 0
      %v626 = vsel %vm419, %v623, 0
      %628 = vmatpush.xpose.msra.mxu0 0.0
      %629 = vmatpush.xpose.msra.mxu0 0.0
      %630 = vmatpush.xpose.msra.mxu0 0.0
      %631 = vmatpush.xpose.msra.mxu0 0.0
      %632 = vmatpush.xpose.msra.mxu0 0.0
      %633 = vmatpush.xpose.msra.mxu0 0.0
      %634 = vmatpush.xpose.msra.mxu0 0.0
      %635 = vmatpush.xpose.msra.mxu0 0.0
      %636 = vmatpush.xpose.msra.mxu0 0.0
      %637 = vmatpush.xpose.msra.mxu0 0.0
      %638 = vmatpush.xpose.msra.mxu0 0.0
      %639 = vmatpush.xpose.msra.mxu0 0.0
      %640 = vmatpush.xpose.msra.mxu0 0.0
      %641 = vmatpush.xpose.msra.mxu0 0.0
      %642 = vmatpush.xpose.msra.mxu0 0.0
      %643 = vmatpush.xpose.msra.mxu0 %v626
      %644 = vmatmul.f32.gmra.mxu0 %v624
      %v645 = vpop.f32.mrf.mxu0
      %v646 = vadd.f32 0.0, %v645
      %647 = vdwg.mxu0
      %v648 = vsel %vm419, %v646, -inf
      %649 = vmax.xlane.f32.xlu0 %v648
      %v650 = vpop.xlane.xlu0 %649
      %v651 = vsub.f32 %v646, %v650
      %v652 = vmul.f32 %v651, 1.442695
      %v653 = vpow.pop %v652
      %v654 = vsel %vm419, %v653, 0.0
      %655 = vadd.xlane.f32.xlu0 %v654
      %v656 = vpop.xlane.xlu0 %655
      %v657 = vrcp.pop %v656
      %v658 = vmul.f32 %v656, %v657
      %v659 = vsub.f32 2.0, %v658
      %v660 = vmul.f32 %v657, %v659
      %v661 = vmul.f32 %v653, %v660
      %662 = vrot.lane.b32.xlu0 %v414, 40
      %v663 = vpop.permute.xlu0 %662
      %v666 = vsel %vm419, %v661, 0
      %668 = vmatpush.msra.mxu0 0.0
      %669 = vmatpush.msra.mxu0 0.0
      %670 = vmatpush.msra.mxu0 0.0
      %671 = vmatpush.msra.mxu0 0.0
      %672 = vmatpush.msra.mxu0 0.0
      %673 = vmatpush.msra.mxu0 0.0
      %674 = vmatpush.msra.mxu0 0.0
      %675 = vmatpush.msra.mxu0 0.0
      %676 = vmatpush.msra.mxu0 0.0
      %677 = vmatpush.msra.mxu0 0.0
      %678 = vmatpush.msra.mxu0 0.0
      %679 = vmatpush.msra.mxu0 0.0
      %680 = vmatpush.msra.mxu0 0.0
      %681 = vmatpush.msra.mxu0 0.0
      %682 = vmatpush.msra.mxu0 0.0
      %683 = vmatpush.msra.mxu0 %v663
      %684 = vmatmul.f32.gmra.mxu0 %v666
      %v685 = vpop.f32.mrf.mxu0
      %v686 = vadd.f32 0.0, %v685
      %687 = vdwg.mxu0
      %689 = vrot.lane.b32.xlu0 %v550, 8
      %v690 = vpop.permute.xlu0 %689
      %693 = vrot.lane.b32.xlu0 %v618, 16
      %v694 = vpop.permute.xlu0 %693
      %697 = vrot.lane.b32.xlu0 %v686, 24
      %v698 = vpop.permute.xlu0 %697
      %v700 = vsel %vm419, %v482, %v690
      %v701 = vsel %vm360, %v700, %v694
      %vm702 = vcmask 195584
      %v703 = vsel %vm702, %v701, %v698
      %v704 = vld [vmem:[%s5] sm:$0xff]
      %v705 = vld [vmem:[%s5 + $0x8] sm:$0xff]
      %v706 = vld [vmem:[%s5 + $0x10] sm:$0xff]
      %v707 = vld [vmem:[%s5 + $0x18] sm:$0xff]
      %v708 = vperm.slane %v355, 0
      %v710 = vsel %vm392, %v703, 0
      %712 = vmatpush.msra.mxu0 0.0
      %713 = vmatpush.msra.mxu0 0.0
      %714 = vmatpush.msra.mxu0 0.0
      %715 = vmatpush.msra.mxu0 0.0
      %716 = vmatpush.msra.mxu0 0.0
      %717 = vmatpush.msra.mxu0 0.0
      %718 = vmatpush.msra.mxu0 0.0
      %719 = vmatpush.msra.mxu0 0.0
      %720 = vmatpush.msra.mxu0 0.0
      %721 = vmatpush.msra.mxu0 0.0
      %722 = vmatpush.msra.mxu0 0.0
      %723 = vmatpush.msra.mxu0 0.0
      %724 = vmatpush.msra.mxu0 %v707
      %725 = vmatpush.msra.mxu0 %v706
      %726 = vmatpush.msra.mxu0 %v705
      %727 = vmatpush.msra.mxu0 %v704
      %728 = vmatmul.f32.gmra.mxu0 %v710
      %v729 = vpop.f32.mrf.mxu0
      %v730 = vadd.f32 %v708, %v729
      %731 = vdwg.mxu0
      %v732 = vadd.f32 %v382, %v730
      %v733 = vsel %vm392, %v732, 0.0
      %734 = vadd.xlane.f32.xlu0 %v733
      %v735 = vpop.xlane.xlu0 %734
      %v736 = vrcp.pop 32.0
      %v737 = vmul.f32 32.0, %v736
      %v738 = vsub.f32 1.0, %v737
      %v739 = vmul.f32 %v736, %v738
      %v740 = vadd.f32 %v736, %v739
      %vm741 = vweird.f32 %v736
      %v742 = vsel %vm741, %v736, %v740
      %v743 = vmul.f32 %v735, %v742
      %v744 = vsub.f32 %v732, %v743
      %v745 = vmul.f32 %v744, %v744
      %v746 = vsel %vm392, %v745, 0.0
      %747 = vadd.xlane.f32.xlu0 %v746
      %v748 = vpop.xlane.xlu0 %747
      %v749 = vmul.f32 %v748, %v742
      %v750 = vadd.f32 %v749, 1e-05
      %v751 = vrsqrt.pop %v750
      %v752 = vmul.f32 %v751, %v750
      %v753 = vmul.f32 %v752, %v751
      %v754 = vmul.f32 0.5, %v753
      %v755 = vsub.f32 1.5, %v754
      %v756 = vmul.f32 %v751, %v755
      %vm757 = vweird.f32 %v750
      %vm758 = vweird.f32 %v751
      %vm759 = vmor %vm757, %vm758
      %v760 = vsel %vm759, %v751, %v756
      %v761 = vmul.f32 %v744, %v760
      %v762 = vperm.slane %v355, 1
      %v763 = vmul.f32 %v761, %v762
      %v764 = vperm.slane %v355, 2
      %v765 = vadd.f32 %v763, %v764
      %v766 = vld [vmem:[%s6] sm:$0xff]
      %v767 = vld [vmem:[%s6 + $0x8] sm:$0xff]
      %v768 = vld [vmem:[%s6 + $0x10] sm:$0xff]
      %v769 = vld [vmem:[%s6 + $0x18] sm:$0xff]
      %v770 = vld [vmem:[%s7] sm:$0x1]
      %v772 = vperm.slane %v770, 0
      %v775 = vsel %vm392, %v765, 0
      %777 = vmatpush.msra.mxu0 0.0
      %778 = vmatpush.msra.mxu0 0.0
      %779 = vmatpush.msra.mxu0 0.0
      %780 = vmatpush.msra.mxu0 0.0
      %781 = vmatpush.msra.mxu0 0.0
      %782 = vmatpush.msra.mxu0 0.0
      %783 = vmatpush.msra.mxu0 0.0
      %784 = vmatpush.msra.mxu0 0.0
      %785 = vmatpush.msra.mxu0 0.0
      %786 = vmatpush.msra.mxu0 0.0
      %787 = vmatpush.msra.mxu0 0.0
      %788 = vmatpush.msra.mxu0 0.0
      %789 = vmatpush.msra.mxu0 %v769
      %790 = vmatpush.msra.mxu0 %v768
      %791 = vmatpush.msra.mxu0 %v767
      %792 = vmatpush.msra.mxu0 %v766
      %793 = vmatmul.f32.gmra.mxu0 %v775
      %v794 = vpop.f32.mrf.mxu0
      %v795 = vadd.f32 %v772, %v794
      %796 = vdwg.mxu0
      %v797 = vmax.f32 %v795, 0.0
      %v798 = vld [vmem:[%s8] sm:$0xff]
      %v799 = vld [vmem:[%s8 + $0x8] sm:$0xff]
      %v800 = vld [vmem:[%s8 + $0x10] sm:$0xff]
      %v801 = vld [vmem:[%s8 + $0x18] sm:$0xff]
      %v802 = vld [vmem:[%s8 + $0x20] sm:$0xff]
      %v803 = vld [vmem:[%s8 + $0x28] sm:$0xff]
      %v804 = vld [vmem:[%s8 + $0x30] sm:$0xff]
      %v805 = vld [vmem:[%s8 + $0x38] sm:$0xff]
      %v806 = vld [vmem:[%s8 + $0x40] sm:$0xff]
      %v807 = vld [vmem:[%s8 + $0x48] sm:$0xff]
      %v808 = vld [vmem:[%s8 + $0x50] sm:$0xff]
      %v809 = vld [vmem:[%s8 + $0x58] sm:$0xff]
      %v810 = vld [vmem:[%s8 + $0x60] sm:$0xff]
      %v811 = vld [vmem:[%s8 + $0x68] sm:$0xff]
      %v812 = vld [vmem:[%s8 + $0x70] sm:$0xff]
      %v813 = vld [vmem:[%s8 + $0x78] sm:$0xff]
      %v814 = vperm.slane %v355, 5
      %815 = vmatpush.msra.mxu0 %v813
      %816 = vmatpush.msra.mxu0 %v812
      %817 = vmatpush.msra.mxu0 %v811
      %818 = vmatpush.msra.mxu0 %v810
      %819 = vmatpush.msra.mxu0 %v809
      %820 = vmatpush.msra.mxu0 %v808
      %821 = vmatpush.msra.mxu0 %v807
      %822 = vmatpush.msra.mxu0 %v806
      %823 = vmatpush.msra.mxu0 %v805
      %824 = vmatpush.msra.mxu0 %v804
      %825 = vmatpush.msra.mxu0 %v803
      %826 = vmatpush.msra.mxu0 %v802
      %827 = vmatpush.msra.mxu0 %v801
      %828 = vmatpush.msra.mxu0 %v800
      %829 = vmatpush.msra.mxu0 %v799
      %830 = vmatpush.msra.mxu0 %v798
      %831 = vmatmul.f32.gmra.mxu0 %v797
      %v832 = vpop.f32.mrf.mxu0
      %v833 = vadd.f32 %v814, %v832
      %834 = vdwg.mxu0
      %v835 = vadd.f32 %v765, %v833
      %v836 = vsel %vm392, %v835, 0.0
      %837 = vadd.xlane.f32.xlu0 %v836
      %v838 = vpop.xlane.xlu0 %837
      %v839 = vmul.f32 %v838, %v742
      %v840 = vsub.f32 %v835, %v839
      %v841 = vmul.f32 %v840, %v840
      %v842 = vsel %vm392, %v841, 0.0
      %843 = vadd.xlane.f32.xlu0 %v842
      %v844 = vpop.xlane.xlu0 %843
      %v845 = vmul.f32 %v844, %v742
      %v846 = vadd.f32 %v845, 1e-05
      %v847 = vrsqrt.pop %v846
      %v848 = vmul.f32 %v847, %v846
      %v849 = vmul.f32 %v848, %v847
      %v850 = vmul.f32 0.5, %v849
      %v851 = vsub.f32 1.5, %v850
      %v852 = vmul.f32 %v847, %v851
      %vm853 = vweird.f32 %v846
      %vm854 = vweird.f32 %v847
      %vm855 = vmor %vm853, %vm854
      %v856 = vsel %vm855, %v847, %v852
      %v857 = vmul.f32 %v840, %v856
      %v858 = vperm.slane %v355, 3
      %v859 = vmul.f32 %v857, %v858
      %v860 = vperm.slane %v355, 4
      %v861 = vadd.f32 %v859, %v860
      %v862 = vperm.slane %v355, 6
      %v863 = vmul.f32 %v861, %v862
      %v864 = vsel %vm392, %v863, 0.0
      %865 = vadd.xlane.f32.xlu0 %v864
      %v866 = vpop.xlane.xlu0 %865
      %v867 = vperm.slane %v355, 7
      %v868 = vadd.f32 %v866, %v867
      %v869 = vxor.u32 %v868, 2147483648
      %v870 = vmul.f32 %v869, 1.442695
      %v871 = vpow.pop %v870
      %v872 = vadd.f32 %v871, 1.0
      %v873 = vrcp.pop %v872
      %v874 = vmul.f32 %v872, %v873
      %v875 = vsub.f32 1.0, %v874
      %v876 = vmul.f32 %v873, %v875
      %v877 = vadd.f32 %v873, %v876
      %vm878 = vweird.f32 %v872
      %vm879 = vweird.f32 %v873
      %vm880 = vmor %vm878, %vm879
      %v881 = vsel %vm880, %v873, %v877
      %v882 = vand.u32 2147483647, %v872
      %vm883 = vcmp.eq.f32.partialorder %v882, 8.507059e+37
      %v884 = vand.u32 %v872, 2147483648
      %v885 = vor.u32 1.1754944e-38, %v884
      %v886 = vsel %vm883, %v885, %v881
      %v887 = vmul.f32 1.0, %v886
      %v888 = vsub.f32 %v887, 0.4
      %vm889 = vcmask 7168
      %890 = vst.msk [vmem:[%s354] sm:$0xff] %vm889, %v888
      %p891 = scmp.lt.s32.totalorder %s21, 1
      %s892 = scalar_select %p891, %s21, 1
      %s893 = smul.addr %s892, 8
      %s894 = scalar_lea.vmem %s10, %s893
      // Predicated region
      $region61: #{transformer_forward.1} parent=59 // pred_check
        %p895 = pneg %p254
      $region62: #{transformer_forward.1} parent=59 // pred_check_branch
        %897 = sbr.rel (%p895) target = $region64
      $region63: #{transformer_forward.1} parent=59 // pred_region
        _
      $region64: #{transformer_forward.1} parent=59 // pred_fallthru
        _
    $region60: #{transformer_forward.1} parent=5 // pred_fallthru
      _
    %p898 = scmp.le.s32.totalorder 2, %s16
    // Predicated region
    $region65: #{transformer_forward.1} parent=5 // pred_check
      %p899 = pneg %p898
    $region66: #{transformer_forward.1} parent=5 // pred_check_branch
      %901 = sbr.rel (%p899) target = $region68
    $region67: #{transformer_forward.1} parent=5 // pred_region
      %s902 = ssub.s32 %s16, 2
      // Predicated region
      $region69: #{transformer_forward.1} parent=67 // pred_check
        %p903 = pneg %p260
      $region70: #{transformer_forward.1} parent=67 // pred_check_branch
        %905 = sbr.rel (%p903) target = $region72
      $region71: #{transformer_forward.1} parent=67 // pred_region
        %p906 = scmp.lt.s32.totalorder %s22, 1
        %s907 = scalar_select %p906, %s22, 1
        %s908 = smul.addr %s907, 8
        %s909 = scalar_lea.vmem %s10, %s908
      $region72: #{transformer_forward.1} parent=67 // pred_fallthru
        _
    $region68: #{transformer_forward.1} parent=5 // pred_fallthru
      _
  $region6: #{transformer_forward.1} parent=0 // loop_footer
    %s20 = sadd.s32 1, %s16
  $region7: #{transformer_forward.1} parent=0 // loop_footer_branch
    %15 = sbr.rel target = $region3
  $region8: #{transformer_forward.1} parent=0 // loop_exit
    _

</llo_original>
